<compile_context>
chip_gen: v7x
topology: tpu7x:2x2x1
jax: 0.10.0
libtpu: 0.0.40
codegen_flags: <defaults>
</compile_context>

<pallas_src>
import functools

import jax
import jax.numpy as jnp
from jax import lax
from jax.experimental import pallas as pl
from jax.experimental.pallas import tpu as pltpu

_EPS = 1e-12  # F.normalize clamps the *norm* at eps -> clamp sum-of-squares at eps^2.


def _round_up(x, m):
    return (x + m - 1) // m * m


def _sum2d(x):
    # (R, C) -> (1, 1): lane reduction then sublane reduction (both are
    # simple Mosaic lowerings); kept 2-D so accumulator adds broadcast.
    return jnp.sum(jnp.sum(x, axis=1, keepdims=True), axis=0, keepdims=True)


def _siglip2_kernel(img_ref, txt_ref, out_ref, *, tm, tn, inv_temperature):
    """One (tm, tn) tile of the [B, B] logits.

    img_ref: [tm, D] normalized image rows (input dtype), resident across j.
    txt_ref: [D, tn] normalized, pre-transposed text rows (input dtype).
    out_ref: [8, 128] f32 accumulator block, resident across the inner j axis.
    """
    i = pl.program_id(0)
    j = pl.program_id(1)

    @pl.when(j == 0)
    def _init():
        out_ref[...] = jnp.zeros_like(out_ref)

    # Standard [M, K] @ [K, N] contraction: bf16 operands stay bf16 on the
    # MXU (v6e/v7x fast path), accumulation is f32.
    logits = jnp.dot(img_ref[...], txt_ref[...],
                     preferred_element_type=jnp.float32)
    if inv_temperature != 1.0:
        # Applied to the f32 logits (not folded into bf16 operands) so small
        # temperatures do not amplify bf16 rounding error.
        logits = logits * jnp.float32(inv_temperature)

    # BCE-with-logits vs identity targets: l(x, y) = softplus(x) - x*y.
    # Padded rows/cols have exactly-zero logits; their softplus(0) = ln 2
    # contribution is subtracted analytically in the wrapper, so no validity
    # mask is needed here.
    # TODO(synk): on v6e/v7x, evaluate exp/log1p in bf16 if the single EUP
    # slot ever binds (keep f32 on v5e -- no bf16 EUP there).
    softplus = jnp.maximum(logits, 0.0) + jnp.log1p(jnp.exp(-jnp.abs(logits)))
    out_ref[...] += _sum2d(softplus)

    # Diagonal subtraction only on the (few) tiles the diagonal crosses.
    row0 = i * tm
    col0 = j * tn
    diag_hit = (row0 < col0 + tn) & (col0 < row0 + tm)

    @pl.when(diag_hit)
    def _diag():
        row = row0 + lax.broadcasted_iota(jnp.int32, (tm, tn), 0)
        col = col0 + lax.broadcasted_iota(jnp.int32, (tm, tn), 1)
        out_ref[...] -= _sum2d(jnp.where(row == col, logits, 0.0))


def _pick_tiles(B, D, itemsize):
    """Generation-aware (tm, tn) and VMEM limit."""
    b8 = _round_up(B, 8)
    tn = min(256, b8)  # MXU-native on v6e/v7x, 2x128 on v5e.

    try:
        vmem_cap = int(pltpu.get_tpu_info().vmem_capacity_bytes)
    except Exception:  # conservative fallback (v7x per-core VMEM)
        vmem_cap = 64 << 20
    # Block budget: ~32 MiB on v7x (64 MiB VMEM), up to 64 MiB on v5e/v6e.
    budget = min(vmem_cap // 2, 64 << 20)

    def vmem_need(tm):
        return (2 * tm * D * itemsize      # image block, double buffered
                + 2 * D * tn * itemsize    # text block, double buffered
                + 3 * tm * tn * 4          # f32 logits/softplus temporaries
                + 2 * 8 * 128 * 4          # output accumulator block
                + (2 << 20))               # internal scratch headroom

    tm = 8
    for cand in (1024, 512, 256, 128, 64, 32, 16, 8):
        cand = min(cand, b8)
        if vmem_need(cand) <= budget:
            tm = cand
            break
    # TODO(synk): if even tm == 8 blows the budget (huge D), add a feature
    # (K) grid axis / inner emit_pipeline loop instead of full-D blocks.

    vmem_limit = int(min(max(vmem_need(tm) + (16 << 20), 32 << 20),
                         (vmem_cap * 3) // 4))
    return tm, tn, vmem_limit


def siglip2_loss(image_features, text_features, temperature=1.0):
    """SigLIP2 loss (reduction='mean') for [B, D] image/text embeddings."""
    # TODO(synk): reduction='none' / 'sum' (full [B,B] per-pair losses, both
    # directions) is not wired up; this implements the module default 'mean'.
    B, D = image_features.shape
    assert text_features.shape == (B, D)
    in_dtype = image_features.dtype
    itemsize = jnp.dtype(in_dtype).itemsize

    # L2-normalize once (O(B*D)) instead of per tile inside the kernel;
    # rsqrt with F.normalize's eps clamp (on the norm -> eps^2 on the SS).
    imf = image_features.astype(jnp.float32)
    txf = text_features.astype(jnp.float32)
    imf = imf * lax.rsqrt(
        jnp.maximum(jnp.sum(imf * imf, axis=-1, keepdims=True), _EPS * _EPS))
    txf = txf * lax.rsqrt(
        jnp.maximum(jnp.sum(txf * txf, axis=-1, keepdims=True), _EPS * _EPS))
    imf = imf.astype(in_dtype)   # bf16 inputs stay bf16 -> MXU fast path
    txf = txf.astype(in_dtype)

    tm, tn, vmem_limit = _pick_tiles(B, D, itemsize)
    bm = _round_up(B, tm)
    bn = _round_up(B, tn)
    if bm != B:
        imf = jnp.pad(imf, ((0, bm - B), (0, 0)))
    if bn != B:
        txf = jnp.pad(txf, ((0, bn - B), (0, 0)))
    txt_t = txf.T  # [D, bn]: feeds the MXU in standard [K, N] form.

    gi = bm // tm
    gj = bn // tn

    kernel = functools.partial(
        _siglip2_kernel, tm=tm, tn=tn,
        inv_temperature=1.0 / float(temperature))

    partials = pl.pallas_call(
        kernel,
        out_shape=jax.ShapeDtypeStruct((gi * 8, 128), jnp.float32),
        grid_spec=pltpu.PrefetchScalarGridSpec(
            num_scalar_prefetch=0,
            grid=(gi, gj),
            in_specs=[
                # Image block is resident across the inner j loop.
                pl.BlockSpec((tm, D), lambda i, j: (i, 0)),
                # TODO(synk): pipeline_mode=pl.Buffered(3) here if profiling
                # ever shows exposed text DMA for small D.
                pl.BlockSpec((D, tn), lambda i, j: (0, j)),
            ],
            out_specs=pl.BlockSpec((8, 128), lambda i, j: (i, 0)),
        ),
        compiler_params=pltpu.CompilerParams(
            dimension_semantics=("parallel", "arbitrary"),
            vmem_limit_bytes=vmem_limit),
    )(imf, txt_t)

    # Every element of an (8,128) output block carries the same per-i sum.
    per_row_block = partials.reshape(gi, 8, 128)[:, 0, 0]
    total = jnp.sum(per_row_block)

    # Remove the contribution of zero-padded rows/cols: their logits are
    # exactly 0, each adding softplus(0) = log(2) (and nothing on the diag).
    n_pad = bm * bn - B * B
    if n_pad:
        total = total - jnp.float32(n_pad) * jnp.log1p(jnp.float32(1.0))

    # mean over B^2 pairs; with identity targets the t2i direction has the
    # same mean, so 0.5*(i2t + t2i) == this value.
    return total / jnp.float32(B * B)


def _reference(image_features, text_features, temperature=1.0):
    """Pure-JAX f32 mirror of the PyTorch module (reduction='mean')."""
    eps = 1e-12
    imf = image_features.astype(jnp.float32)
    txf = text_features.astype(jnp.float32)
    imf = imf / jnp.maximum(jnp.linalg.norm(imf, axis=-1, keepdims=True), eps)
    txf = txf / jnp.maximum(jnp.linalg.norm(txf, axis=-1, keepdims=True), eps)
    logits = imf @ txf.T / temperature
    targets = jnp.eye(logits.shape[0], dtype=jnp.float32)
    bce = lambda x, y: jnp.mean(
        jnp.maximum(x, 0.0) - x * y + jnp.log1p(jnp.exp(-jnp.abs(x))))
    return 0.5 * (bce(logits, targets) + bce(logits.T, targets))


if __name__ == "__main__":
    key = jax.random.PRNGKey(0)
    k1, k2, k3, k4 = jax.random.split(key, 4)

    # Case 1: module defaults, aligned batch.
    B, D = 8, 32
    img = jax.random.normal(k1, (B, D), dtype=jnp.float32)
    txt = jax.random.normal(k2, (B, D), dtype=jnp.float32)
    loss = jax.block_until_ready(siglip2_loss(img, txt, temperature=1.0))
    ref = _reference(img, txt, temperature=1.0)
    assert jnp.allclose(loss, ref, atol=1e-4, rtol=1e-4), (loss, ref)

    # Case 2: non-multiple batch (padding + analytic ln2 correction) and a
    # non-unit temperature (exercises the post-matmul f32 scale).
    B2, D2 = 13, 32
    img2 = jax.random.normal(k3, (B2, D2), dtype=jnp.float32)
    txt2 = jax.random.normal(k4, (B2, D2), dtype=jnp.float32)
    loss2 = jax.block_until_ready(siglip2_loss(img2, txt2, temperature=0.5))
    ref2 = _reference(img2, txt2, temperature=0.5)
    assert jnp.allclose(loss2, ref2, atol=1e-4, rtol=1e-4), (loss2, ref2)

    # Case 3: bf16 embeddings (MXU bf16 fast path); loose tolerance covers
    # the bf16 quantization of the normalized features vs the f32 reference.
    B3, D3 = 16, 32
    img3 = jax.random.normal(k1, (B3, D3), dtype=jnp.float32).astype(jnp.bfloat16)
    txt3 = jax.random.normal(k2, (B3, D3), dtype=jnp.float32).astype(jnp.bfloat16)
    loss3 = jax.block_until_ready(siglip2_loss(img3, txt3, temperature=1.0))
    ref3 = _reference(img3, txt3, temperature=1.0)
    assert jnp.allclose(loss3, ref3, atol=2e-2, rtol=2e-2), (loss3, ref3)

    print("KERNEL_OK")
</pallas_src>

<mosaic_0001>
module attributes {stable_mosaic.version = 11 : i64} {
  func.func @_siglip2_kernel(%arg0: i32, %arg1: i32, %arg2: memref<8x32xf32, #tpu.memory_space<vmem>>, %arg3: memref<32x8xf32, #tpu.memory_space<vmem>>, %arg4: memref<8x128xf32, #tpu.memory_space<vmem>>) attributes {dimension_semantics = [#tpu.dimension_semantics<parallel>, #tpu.dimension_semantics<arbitrary>], iteration_bounds = array<i64: 1, 1>, scalar_prefetch = 0 : i64, scratch_operands = 0 : i64, tpu.core_type = #tpu.core_type<tc>, window_params = [{transform_indices = @transform_0, window_bounds = array<i64: 8, 32>}, {transform_indices = @transform_1, window_bounds = array<i64: 32, 8>}, {transform_indices = @transform_2, window_bounds = array<i64: 8, 128>}]} {
    %c0_i32 = arith.constant 0 : i32
    %0 = arith.cmpi eq, %arg1, %c0_i32 : i32
    %1 = arith.extui %0 : i1 to i32
    %c0_i32_0 = arith.constant 0 : i32
    %2 = arith.cmpi ne, %1, %c0_i32_0 : i32
    scf.if %2 {
      %cst_16 = arith.constant 0.000000e+00 : f32
      %31 = vector.broadcast %cst_16 : f32 to vector<8x128xf32>
      %c0_17 = arith.constant 0 : index
      %c0_18 = arith.constant 0 : index
      %32 = vector.load %arg4[%c0_17, %c0_18] : memref<8x128xf32, #tpu.memory_space<vmem>>, vector<8x128xf32>
      tpu.vector_store %arg4[%c0_17, %c0_18], %31 {strides = array<i32>} : memref<8x128xf32, #tpu.memory_space<vmem>>, vector<8x128xf32>,
    } else {
    }
    %c0 = arith.constant 0 : index
    %c0_1 = arith.constant 0 : index
    %3 = vector.load %arg2[%c0, %c0_1] : memref<8x32xf32, #tpu.memory_space<vmem>>, vector<8x32xf32>
    %c0_2 = arith.constant 0 : index
    %c0_3 = arith.constant 0 : index
    %4 = vector.load %arg3[%c0_2, %c0_3] : memref<32x8xf32, #tpu.memory_space<vmem>>, vector<32x8xf32>
    %cst = arith.constant dense<0.000000e+00> : vector<8x8xf32>
    %5 = tpu.matmul %3, %4, %cst {dimension_numbers = #tpu.dot_dimension_numbers<[1], [0], [0], [1], [0, 0, 1, 1], [], []>} : vector<8x32xf32>, vector<32x8xf32>, vector<8x8xf32> -> vector<8x8xf32>
    %cst_4 = arith.constant 0.000000e+00 : f32
    %6 = vector.broadcast %cst_4 : f32 to vector<8x8xf32>
    %7 = arith.maximumf %5, %6 : vector<8x8xf32>
    %8 = math.absf %5 : vector<8x8xf32>
    %cst_5 = arith.constant 0.000000e+00 : f32
    %9 = vector.broadcast %cst_5 : f32 to vector<8x8xf32>
    %10 = arith.subf %9, %8 : vector<8x8xf32>
    %11 = math.exp %10 : vector<8x8xf32>
    %12 = math.log1p %11 : vector<8x8xf32>
    %13 = arith.addf %7, %12 : vector<8x8xf32>
    %c0_6 = arith.constant 0 : index
    %c0_7 = arith.constant 0 : index
    %14 = vector.load %arg4[%c0_6, %c0_7] : memref<8x128xf32, #tpu.memory_space<vmem>>, vector<8x128xf32>
    %cst_8 = arith.constant dense<0.000000e+00> : vector<8xf32>
    %15 = vector.multi_reduction <add>, %13, %cst_8 [1] : vector<8x8xf32> to vector<8xf32>
    %16 = vector.shape_cast %15 : vector<8xf32> to vector<8x1xf32>
    %cst_9 = arith.constant dense<0.000000e+00> : vector<1xf32>
    %17 = vector.multi_reduction <add>, %16, %cst_9 [0] : vector<8x1xf32> to vector<1xf32>
    %18 = vector.shape_cast %17 : vector<1xf32> to vector<1x1xf32>
    %19 = vector.broadcast %18 : vector<1x1xf32> to vector<8x128xf32>
    %20 = arith.addf %14, %19 : vector<8x128xf32>
    %c0_10 = arith.constant 0 : index
    %c0_11 = arith.constant 0 : index
    %21 = vector.load %arg4[%c0_10, %c0_11] : memref<8x128xf32, #tpu.memory_space<vmem>>, vector<8x128xf32>
    tpu.vector_store %arg4[%c0_10, %c0_11], %20 {strides = array<i32>} : memref<8x128xf32, #tpu.memory_space<vmem>>, vector<8x128xf32>,
    %c8_i32 = arith.constant 8 : i32
    %22 = arith.muli %arg0, %c8_i32 : i32
    %c8_i32_12 = arith.constant 8 : i32
    %23 = arith.muli %arg1, %c8_i32_12 : i32
    %c8_i32_13 = arith.constant 8 : i32
    %24 = arith.addi %23, %c8_i32_13 : i32
    %25 = arith.cmpi slt, %22, %24 : i32
    %c8_i32_14 = arith.constant 8 : i32
    %26 = arith.addi %22, %c8_i32_14 : i32
    %27 = arith.cmpi slt, %23, %26 : i32
    %28 = arith.andi %25, %27 : i1
    %29 = arith.extui %28 : i1 to i32
    %c0_i32_15 = arith.constant 0 : i32
    %30 = arith.cmpi ne, %29, %c0_i32_15 : i32
    scf.if %30 {
      %31 = tpu.iota {dimensions = array<i32: 0>} : vector<8x8xi32>
      %32 = vector.broadcast %22 : i32 to vector<8x8xi32>
      %33 = arith.addi %32, %31 : vector<8x8xi32>
      %34 = tpu.iota {dimensions = array<i32: 1>} : vector<8x8xi32>
      %35 = vector.broadcast %23 : i32 to vector<8x8xi32>
      %36 = arith.addi %35, %34 : vector<8x8xi32>
      %c0_16 = arith.constant 0 : index
      %c0_17 = arith.constant 0 : index
      %37 = vector.load %arg4[%c0_16, %c0_17] : memref<8x128xf32, #tpu.memory_space<vmem>>, vector<8x128xf32>
      %38 = arith.cmpi eq, %33, %36 : vector<8x8xi32>
      %cst_18 = arith.constant 0.000000e+00 : f32
      %39 = vector.broadcast %cst_18 : f32 to vector<8x8xf32>
      %40 = arith.select %38, %5, %39 : vector<8x8xi1>, vector<8x8xf32>
      %cst_19 = arith.constant dense<0.000000e+00> : vector<8xf32>
      %41 = vector.multi_reduction <add>, %40, %cst_19 [1] : vector<8x8xf32> to vector<8xf32>
      %42 = vector.shape_cast %41 : vector<8xf32> to vector<8x1xf32>
      %cst_20 = arith.constant dense<0.000000e+00> : vector<1xf32>
      %43 = vector.multi_reduction <add>, %42, %cst_20 [0] : vector<8x1xf32> to vector<1xf32>
      %44 = vector.shape_cast %43 : vector<1xf32> to vector<1x1xf32>
      %45 = vector.broadcast %44 : vector<1x1xf32> to vector<8x128xf32>
      %46 = arith.subf %37, %45 : vector<8x128xf32>
      %c0_21 = arith.constant 0 : index
      %c0_22 = arith.constant 0 : index
      %47 = vector.load %arg4[%c0_21, %c0_22] : memref<8x128xf32, #tpu.memory_space<vmem>>, vector<8x128xf32>
      tpu.vector_store %arg4[%c0_21, %c0_22], %46 {strides = array<i32>} : memref<8x128xf32, #tpu.memory_space<vmem>>, vector<8x128xf32>,
    } else {
    }
    return
  }
  func.func @transform_0(%arg0: i32, %arg1: i32) -> (i32, i32) {
    %c0_i32 = arith.constant 0 : i32
    %c0_i32_0 = arith.constant 0 : i32
    return %arg0, %c0_i32 : i32, i32
  }
  func.func @transform_1(%arg0: i32, %arg1: i32) -> (i32, i32) {
    %c0_i32 = arith.constant 0 : i32
    %c0_i32_0 = arith.constant 0 : i32
    return %c0_i32, %arg1 : i32, i32
  }
  func.func @transform_2(%arg0: i32, %arg1: i32) -> (i32, i32) {
    %c0_i32 = arith.constant 0 : i32
    %c0_i32_0 = arith.constant 0 : i32
    return %arg0, %c0_i32 : i32, i32
  }
}

</mosaic_0001>

<llo_original>
// kernel: tpu_custom_call.1
$region0: #{tpu_custom_call.1}
  #allocation0 [shape = 'u32[]', space=smem, size = 0x4, offset = 0x4, fixed_abs, tag = 'smem constant byte address 0x4 - core index']
  #allocation1 [shape = 'u32[144,128]{1,0:T(1,128)}', space=vmem, size = 0x12000, scoped, tag = 'internal scratch']
  %s0 = inlined_call_operand.vmem [shape: f32[8,32], index: 0, kind: input, shape index: {}]
  %s1 = inlined_call_operand.vmem [shape: f32[32,8], index: 1, kind: input, shape index: {}]
  %s2 = inlined_call_operand.hbm [shape: f32[8,128], index: 2, kind: output, shape index: {}]
  %s3 = sld [smem:[#allocation0]]
  $region26: #{tpu_custom_call.1} parent=0
    _
  %s5 = ssub.s32 1, %s3
  %s6 = scalar_select 0, %s5, %s3
  $region1: #{tpu_custom_call.1} parent=0
    #allocation2 [shape = 'u8[4096]{0}', space=vmem, size = 0x1000, scoped, tag = 'output window, operand 0, single buffered']
    #allocation3 [shape = 's32[1]{0}', space=sflag, size = 0x4, scoped, tag = 'scoped memory for tpu_custom_call.1']
    %7 = vsyncpa [#allocation3], 0
    // Predicated region
    $region2: #{tpu_custom_call.1} parent=1 // pred_check
      _
    $region3: #{tpu_custom_call.1} parent=1 // pred_check_branch
      %9 = sbr.rel (0) target = $region5
    $region4: #{tpu_custom_call.1} parent=1 // pred_region
      _
    $region5: #{tpu_custom_call.1} parent=1 // pred_fallthru
      _
    // Predicated region
    $region6: #{tpu_custom_call.1} parent=1 // pred_check
      _
    $region7: #{tpu_custom_call.1} parent=1 // pred_check_branch
      %11 = sbr.rel (0) target = $region9
    $region8: #{tpu_custom_call.1} parent=1 // pred_region
      _
    $region9: #{tpu_custom_call.1} parent=1 // pred_fallthru
      _
    %p12 = scmp.eq.s32.totalorder 0, 0
    // Predicated region
    $region10: #{tpu_custom_call.1} parent=1 // pred_check
      %p13 = pneg %p12
    $region11: #{tpu_custom_call.1} parent=1 // pred_check_branch
      %15 = sbr.rel (%p13) target = $region13
    $region12: #{tpu_custom_call.1} parent=1 // pred_region
      %16 = vst [vmem:[#allocation2] sm:$0xff] 0.0
    $region13: #{tpu_custom_call.1} parent=1 // pred_fallthru
      _
    %v17 = vld [vmem:[%s0] sm:$0xff]
    %v18 = vld [vmem:[%s1] sm:$0xff]
    %v19 = vld [vmem:[%s1 + $0x8] sm:$0xff]
    %v20 = vld [vmem:[%s1 + $0x10] sm:$0xff]
    %v21 = vld [vmem:[%s1 + $0x18] sm:$0xff]
    %vm22 = vcmask 261120
    %v24 = vsel %vm22, %v17, 0
    %26 = vmatprep.subr.mxu0 0.0
    %27 = vmatpush1.msra.mxu0 %v18
    %28 = vmatprep.subr.mxu0 0.0
    %29 = vmatpush1.msra.mxu0 %v19
    %30 = vmatprep.subr.mxu0 0.0
    %31 = vmatpush1.msra.mxu0 %v20
    %32 = vmatprep.subr.mxu0 0.0
    %33 = vmatpush1.msra.mxu0 %v21
    %34 = vmatprep.subr.mxu0 0.0
    %35 = vmatpush1.msra.mxu0 0.0
    %36 = vmatprep.subr.mxu0 0.0
    %37 = vmatpush1.msra.mxu0 0.0
    %38 = vmatprep.subr.mxu0 0.0
    %39 = vmatpush1.msra.mxu0 0.0
    %40 = vmatprep.subr.mxu0 0.0
    %41 = vmatpush1.msra.mxu0 0.0
    %42 = vmatprep.subr.mxu0 0.0
    %43 = vmatpush1.msra.mxu0 0.0
    %44 = vmatprep.subr.mxu0 0.0
    %45 = vmatpush1.msra.mxu0 0.0
    %46 = vmatprep.subr.mxu0 0.0
    %47 = vmatpush1.msra.mxu0 0.0
    %48 = vmatprep.subr.mxu0 0.0
    %49 = vmatpush1.msra.mxu0 0.0
    %50 = vmatprep.subr.mxu0 0.0
    %51 = vmatpush1.msra.mxu0 0.0
    %52 = vmatprep.subr.mxu0 0.0
    %53 = vmatpush1.msra.mxu0 0.0
    %54 = vmatprep.subr.mxu0 0.0
    %55 = vmatpush1.msra.mxu0 0.0
    %56 = vmatprep.subr.mxu0 0.0
    %57 = vmatpush1.msra.mxu0 0.0
    %58 = vmatprep.subr.mxu0 0.0
    %59 = vmatpush1.msra.mxu0 0.0
    %60 = vmatprep.subr.mxu0 0.0
    %61 = vmatpush1.msra.mxu0 0.0
    %62 = vmatprep.subr.mxu0 0.0
    %63 = vmatpush1.msra.mxu0 0.0
    %64 = vmatprep.subr.mxu0 0.0
    %65 = vmatpush1.msra.mxu0 0.0
    %66 = vmatprep.subr.mxu0 0.0
    %67 = vmatpush1.msra.mxu0 0.0
    %68 = vmatprep.subr.mxu0 0.0
    %69 = vmatpush1.msra.mxu0 0.0
    %70 = vmatprep.subr.mxu0 0.0
    %71 = vmatpush1.msra.mxu0 0.0
    %72 = vmatprep.subr.mxu0 0.0
    %73 = vmatpush1.msra.mxu0 0.0
    %74 = vmatprep.subr.mxu0 0.0
    %75 = vmatpush1.msra.mxu0 0.0
    %76 = vmatprep.subr.mxu0 0.0
    %77 = vmatpush1.msra.mxu0 0.0
    %78 = vmatprep.subr.mxu0 0.0
    %79 = vmatpush1.msra.mxu0 0.0
    %80 = vmatprep.subr.mxu0 0.0
    %81 = vmatpush1.msra.mxu0 0.0
    %82 = vmatprep.subr.mxu0 0.0
    %83 = vmatpush1.msra.mxu0 0.0
    %84 = vmatprep.subr.mxu0 0.0
    %85 = vmatpush1.msra.mxu0 0.0
    %86 = vmatprep.subr.mxu0 0.0
    %87 = vmatpush1.msra.mxu0 0.0
    %88 = vmatprep.subr.mxu0 0.0
    %89 = vmatpush1.msra.mxu0 0.0
    %90 = vmatprep.mubr.f32.mxu0 0.0
    %91 = vmatmul.mubr.f32.gmra.mrb[0].mxu0 %v24
    %v92 = vpop.f32.mrb[0].mxu0
    %v93 = vadd.f32 0.0, %v92
    %v94 = vpop.f32.mrb[0].mxu0
    %95 = vdwg.mxu0
    %v96 = vmax.f32 %v93, 0.0
    %v97 = vand.u32 2147483647, %v93
    %v98 = vsub.f32 0.0, %v97
    %v99 = vmul.f32 %v98, 1.442695
    %v100 = vpow.pop %v99
    %v101 = vadd.f32 %v100, 1.0
    %v102 = vlog2.pop %v101
    %v103 = vmul.f32 %v102, 0.6931472
    %v104 = vmul.f32 -0.5, %v100
    %v105 = vadd.f32 %v104, 1.0
    %v106 = vmul.f32 %v105, %v100
    %v107 = vand.u32 2147483647, %v100
    %vm108 = vcmp.lt.f32.partialorder %v107, 0.0004427343
    %v109 = vsel %vm108, %v106, %v103
    %v110 = vadd.f32 %v96, %v109
    %v111 = vld [vmem:[#allocation2] sm:$0xff]
    %vm112 = vcmask 64512
    %v113 = vsel %vm112, %v110, 0.0
    %114 = vadd.xlane.f32.xlu0 %v113
    %v115 = vpop.xlane.xlu0 %114
    %v116 = vrot.slane %v115, 4
    %v117 = vadd.f32 %v115, %v116
    %v118 = vrot.slane %v117, 2
    %v119 = vadd.f32 %v117, %v118
    %v120 = vrot.slane %v119, 1
    %v121 = vadd.f32 %v119, %v120
    %v122 = vadd.f32 %v111, %v121
    %123 = vst [vmem:[#allocation2] sm:$0xff] %v122
    %s124 = smul.u32 0, 8
    %s125 = smul.u32 0, 8
    %s126 = sadd.s32 %s125, 8
    %p127 = scmp.lt.s32.totalorder %s124, %s126
    %s128 = sadd.s32 %s124, 8
    %p129 = scmp.lt.s32.totalorder %s125, %s128
    %p130 = pnand %p127, %p129
    %p131 = pneg %p130
    // Predicated region
    $region14: #{tpu_custom_call.1} parent=1 // pred_check
      _
    $region15: #{tpu_custom_call.1} parent=1 // pred_check_branch
      %133 = sbr.rel (%p130) target = $region17
    $region16: #{tpu_custom_call.1} parent=1 // pred_region
      %v134 = vlaneseq
      %v135 = vshrl.u32 %v134, 7
      %v136 = vstv %s124
      %v137 = vadd.s32 %v136, %v135
      %v138 = vlaneseq
      %v139 = vand.u32 %v138, 127
      %v140 = vstv %s125
      %v141 = vadd.s32 %v140, %v139
      %v142 = vld [vmem:[#allocation2] sm:$0xff]
      %vm143 = vcmp.eq.s32.totalorder %v137, %v141
      %v144 = vsel %vm143, %v93, 0.0
      %v145 = vsel %vm112, %v144, 0.0
      %146 = vadd.xlane.f32.xlu0 %v145
      %v147 = vpop.xlane.xlu0 %146
      %v148 = vrot.slane %v147, 4
      %v149 = vadd.f32 %v147, %v148
      %v150 = vrot.slane %v149, 2
      %v151 = vadd.f32 %v149, %v150
      %v152 = vrot.slane %v151, 1
      %v153 = vadd.f32 %v151, %v152
      %v154 = vsub.f32 %v142, %v153
      %155 = vst [vmem:[#allocation2] sm:$0xff] %v154
    $region17: #{tpu_custom_call.1} parent=1 // pred_fallthru
      _
    // Predicated region
    $region18: #{tpu_custom_call.1} parent=1 // pred_check
      _
    $region19: #{tpu_custom_call.1} parent=1 // pred_check_branch
      %157 = sbr.rel (0) target = $region21
    $region20: #{tpu_custom_call.1} parent=1 // pred_region
      %s159 = ssub.s32 128, 128
      %160 = vsyncadd [#allocation3], %s159
      %s162 = sshll.u32 [#allocation2], 4
      %s163 = int_to_ptr.vmem [resolvable:$true] %s162
      %165 = dma.vmem_to_hbm [thread:$0]  %s163, 128, %s2, [#allocation3]
    $region21: #{tpu_custom_call.1} parent=1 // pred_fallthru
      _
    // Predicated region
    $region22: #{tpu_custom_call.1} parent=1 // pred_check
      _
    $region23: #{tpu_custom_call.1} parent=1 // pred_check_branch
      %167 = sbr.rel (0) target = $region25
    $region24: #{tpu_custom_call.1} parent=1 // pred_region
      %168 = dma.done [#allocation3], 128
    $region25: #{tpu_custom_call.1} parent=1 // pred_fallthru
      _
    %169 = vsyncpa [#allocation3], 1

</llo_original>
